<compile_context>
chip_gen: v6e
topology: v6e:2x2x1
jax: 0.10.0
libtpu: 0.0.40
codegen_flags: <defaults>
</compile_context>

<pallas_src>
import functools

import jax
import jax.numpy as jnp
from jax import lax
from jax.experimental import pallas as pl
from jax.experimental.pallas import tpu as pltpu

TEMPERATURE = 0.05  # matches EgoNCE.__init__(temperature=0.05); no learnable params

_MAX_BLOCK_BYTES = 8 * 1024 * 1024   # f32 bytes per (TM, N) input block (double-buffered)
_VMEM_LIMIT_BYTES = 32 * 1024 * 1024  # explicit scoped-VMEM request (safe on v5e/v6e/v7x)


def _egonce_kernel(x_ref, o_ref, col_acc_ref, scal_acc_ref, *, temperature):
    i = pl.program_id(0)
    nsteps = pl.num_programs(0)

    @pl.when(i == 0)
    def _init():
        col_acc_ref[...] = jnp.zeros_like(col_acc_ref)
        scal_acc_ref[0, 0] = 0.0

    x = x_ref[...].astype(jnp.float32)          # bf16 inputs are upcast in-kernel
    tm, n = x.shape                             # static block shape
    inv_t = 1.0 / temperature
    g = inv_t                                   # |x| <= 1  =>  max(scaled) <= g
    scaled = x * inv_t

    # Single shared exp pass feeds both row- and column-logsumexp.
    e = jnp.exp(scaled - g)

    # Row logsumexp + trace contributions, fused into per-row (axis=1) reduces followed by
    # one tiny (TM, 1) -> scalar reduce.  Diagonal entries of this row tile live at
    # column (i*TM + row); extract them with an iota mask (VPU select, hidden under EUP).
    row_sum = jnp.sum(e, axis=1, keepdims=True)                       # (TM, 1)
    ri = lax.broadcasted_iota(jnp.int32, scaled.shape, 0)
    ci = lax.broadcasted_iota(jnp.int32, scaled.shape, 1)
    diag_mask = ci == (i * tm + ri)
    diag_vals = jnp.sum(jnp.where(diag_mask, scaled, 0.0), axis=1, keepdims=True)  # (TM, 1)

    scal_acc_ref[0, 0] += tm * g + jnp.sum(jnp.log(row_sum) - 2.0 * diag_vals)

    # Column exp-sum accumulation: keep the per-step work on the VPU (elementwise adds
    # onto an (8, N) scratch); the cross-sublane reduce happens once in the epilogue.
    if tm % 8 == 0 and tm > 8:
        col_partial = jnp.sum(e.reshape(tm // 8, 8, n), axis=0)   # sublane-aligned fold
    elif tm % 8 == 0:
        col_partial = e
    else:
        col_partial = jnp.sum(e, axis=0, keepdims=True)           # single-block fallback
    col_acc_ref[...] += col_partial

    @pl.when(i == nsteps - 1)
    def _finalize():
        col_sum = jnp.sum(col_acc_ref[...], axis=0, keepdims=True)   # (1, N), one XLU pass
        col_lse_sum = n * g + jnp.sum(jnp.log(col_sum))
        o_ref[0, 0] = (scal_acc_ref[0, 0] + col_lse_sum) / n


def egonce_loss(x, *, temperature=TEMPERATURE, tm=None):
    """x: [N, N] cosine-similarity matrix in [-1, 1] (f32 or bf16). Returns scalar f32 loss."""
    n, m = x.shape
    assert n == m, "EgoNCE uses mask=eye(N); the similarity matrix must be square"
    if tm is None:
        if n % 8 == 0:
            # Largest row tile that divides N, is a multiple of 8, and keeps the (TM, N)
            # f32 block <= ~8 MiB so the double-buffered stream fits the 32 MiB scoped VMEM.
            max_rows = max(8, (_MAX_BLOCK_BYTES // (4 * n)) // 8 * 8)
            tm = min(n, max_rows)
            while n % tm != 0:
                tm -= 8
        else:
            # TODO(synk): pad/mask ragged N; for now fall back to one whole-array block.
            tm = n
    assert n % tm == 0, "row tile must divide N"
    sub = 8 if tm % 8 == 0 else 1

    out = pl.pallas_call(
        functools.partial(_egonce_kernel, temperature=temperature),
        out_shape=jax.ShapeDtypeStruct((1, 1), jnp.float32),
        grid_spec=pltpu.PrefetchScalarGridSpec(
            num_scalar_prefetch=0,
            grid=(n // tm,),
            in_specs=[pl.BlockSpec((tm, n), lambda i: (i, 0))],
            out_specs=pl.BlockSpec(memory_space=pltpu.MemorySpace.SMEM),
            scratch_shapes=[
                pltpu.VMEM((sub, n), jnp.float32),   # column exp-sum accumulator
                pltpu.SMEM((1, 1), jnp.float32),     # row-lse / trace scalar accumulator
            ],
        ),
        compiler_params=pltpu.CompilerParams(
            dimension_semantics=("arbitrary",),       # sequential accumulation across tiles
            vmem_limit_bytes=_VMEM_LIMIT_BYTES,
        ),
    )(x)
    return out[0, 0]


def _egonce_ref(x, temperature=TEMPERATURE):
    x = x.astype(jnp.float32)
    n = x.shape[0]
    i_sm = jax.nn.softmax(x / temperature, axis=1)
    j_sm = jax.nn.softmax(x.T / temperature, axis=1)
    mask = jnp.eye(n, dtype=bool)
    idiag = jnp.log(jnp.sum(jnp.where(mask, i_sm, 0.0), axis=1))
    jdiag = jnp.log(jnp.sum(jnp.where(mask, j_sm, 0.0), axis=1))
    return -(idiag.sum() / n) - (jdiag.sum() / n)


if __name__ == "__main__":
    key = jax.random.PRNGKey(0)
    k1, k2 = jax.random.split(key)

    # (A) f32, multi-tile (N=32, TM=8): exercises the row-tiled accumulation path.
    xa = jax.random.uniform(k1, (32, 32), dtype=jnp.float32, minval=-1.0, maxval=1.0)
    la = egonce_loss(xa, tm=8)
    jax.block_until_ready(la)
    ra = _egonce_ref(xa)
    assert jnp.allclose(la, ra, rtol=1e-4, atol=1e-3), (la, ra)

    # (B) f32, wider row tile (N=32, TM=16): exercises the (TM//8, 8, N) column fold.
    lb = egonce_loss(xa, tm=16)
    jax.block_until_ready(lb)
    assert jnp.allclose(lb, ra, rtol=1e-4, atol=1e-3), (lb, ra)

    # (C) f32, auto-selected tile (N=32 -> single tile): exercises the auto-TM path.
    lc = egonce_loss(xa)
    jax.block_until_ready(lc)
    assert jnp.allclose(lc, ra, rtol=1e-4, atol=1e-3), (lc, ra)

    # (D) bf16 input (halves HBM traffic for large N), single whole-array tile (N=8).
    xd = jax.random.uniform(k2, (8, 8), dtype=jnp.float32, minval=-1.0, maxval=1.0)
    xd_bf16 = xd.astype(jnp.bfloat16)
    ld = egonce_loss(xd_bf16)
    jax.block_until_ready(ld)
    rd = _egonce_ref(xd_bf16)
    assert jnp.allclose(ld, rd, rtol=1e-4, atol=1e-3), (ld, rd)

    print("KERNEL_OK")
</pallas_src>

<mosaic_0001>
module attributes {stable_mosaic.version = 11 : i64} {
  func.func @_egonce_kernel(%arg0: i32, %arg1: memref<8x32xf32, #tpu.memory_space<vmem>>, %arg2: memref<1x1xf32, #tpu.memory_space<smem>>, %arg3: memref<8x32xf32, #tpu.memory_space<vmem>>, %arg4: memref<1x1xf32, #tpu.memory_space<smem>>) attributes {dimension_semantics = [#tpu.dimension_semantics<arbitrary>], iteration_bounds = array<i64: 4>, scalar_prefetch = 0 : i64, scratch_operands = 2 : i64, tpu.core_type = #tpu.core_type<tc>, window_params = [{transform_indices = @transform_0, window_bounds = array<i64: 8, 32>}, {transform_indices = @transform_1, window_bounds = array<i64: 1, 1>}]} {
    %c0_i32 = arith.constant 0 : i32
    %0 = arith.cmpi eq, %arg0, %c0_i32 : i32
    %1 = arith.extui %0 : i1 to i32
    %c0_i32_0 = arith.constant 0 : i32
    %2 = arith.cmpi ne, %1, %c0_i32_0 : i32
    scf.if %2 {
      %cst_18 = arith.constant 0.000000e+00 : f32
      %39 = vector.broadcast %cst_18 : f32 to vector<8x32xf32>
      %c0_19 = arith.constant 0 : index
      %c0_20 = arith.constant 0 : index
      %40 = vector.load %arg3[%c0_19, %c0_20] : memref<8x32xf32, #tpu.memory_space<vmem>>, vector<8x32xf32>
      tpu.vector_store %arg3[%c0_19, %c0_20], %39 {strides = array<i32>} : memref<8x32xf32, #tpu.memory_space<vmem>>, vector<8x32xf32>,
      %cst_21 = arith.constant 0.000000e+00 : f32
      %c0_22 = arith.constant 0 : index
      %c0_23 = arith.constant 0 : index
      %41 = memref.load %arg4[%c0_22, %c0_23] : memref<1x1xf32, #tpu.memory_space<smem>>
      memref.store %cst_21, %arg4[%c0_22, %c0_23] : memref<1x1xf32, #tpu.memory_space<smem>>
    } else {
    }
    %c0 = arith.constant 0 : index
    %c0_1 = arith.constant 0 : index
    %3 = vector.load %arg1[%c0, %c0_1] : memref<8x32xf32, #tpu.memory_space<vmem>>, vector<8x32xf32>
    %cst = arith.constant 2.000000e+01 : f32
    %4 = vector.broadcast %cst : f32 to vector<8x32xf32>
    %5 = arith.mulf %3, %4 : vector<8x32xf32>
    %cst_2 = arith.constant 2.000000e+01 : f32
    %6 = vector.broadcast %cst_2 : f32 to vector<8x32xf32>
    %7 = arith.subf %5, %6 : vector<8x32xf32>
    %8 = math.exp %7 : vector<8x32xf32>
    %cst_3 = arith.constant dense<0.000000e+00> : vector<8xf32>
    %9 = vector.multi_reduction <add>, %8, %cst_3 [1] : vector<8x32xf32> to vector<8xf32>
    %10 = vector.shape_cast %9 : vector<8xf32> to vector<8x1xf32>
    %11 = tpu.iota {dimensions = array<i32: 0>} : vector<8x32xi32>
    %12 = tpu.iota {dimensions = array<i32: 1>} : vector<8x32xi32>
    %c8_i32 = arith.constant 8 : i32
    %13 = arith.muli %arg0, %c8_i32 : i32
    %14 = vector.broadcast %13 : i32 to vector<8x32xi32>
    %15 = arith.addi %14, %11 : vector<8x32xi32>
    %16 = arith.cmpi eq, %12, %15 : vector<8x32xi32>
    %cst_4 = arith.constant 0.000000e+00 : f32
    %17 = vector.broadcast %cst_4 : f32 to vector<8x32xf32>
    %18 = arith.select %16, %5, %17 : vector<8x32xi1>, vector<8x32xf32>
    %cst_5 = arith.constant dense<0.000000e+00> : vector<8xf32>
    %19 = vector.multi_reduction <add>, %18, %cst_5 [1] : vector<8x32xf32> to vector<8xf32>
    %20 = vector.shape_cast %19 : vector<8xf32> to vector<8x1xf32>
    %c0_6 = arith.constant 0 : index
    %c0_7 = arith.constant 0 : index
    %21 = memref.load %arg4[%c0_6, %c0_7] : memref<1x1xf32, #tpu.memory_space<smem>>
    %22 = math.log %10 : vector<8x1xf32>
    %cst_8 = arith.constant 2.000000e+00 : f32
    %23 = vector.broadcast %cst_8 : f32 to vector<8x1xf32>
    %24 = arith.mulf %23, %20 : vector<8x1xf32>
    %25 = arith.subf %22, %24 : vector<8x1xf32>
    %26 = vector.shape_cast %25 : vector<8x1xf32> to vector<1x8x1xf32>
    %cst_9 = arith.constant dense<0.000000e+00> : vector<1xf32>
    %27 = vector.multi_reduction <add>, %26, %cst_9 [1, 2] : vector<1x8x1xf32> to vector<1xf32>
    %28 = vector.shape_cast %27 : vector<1xf32> to vector<1x1x1xf32>
    %29 = vector.extract %28[0, 0, 0] : f32 from vector<1x1x1xf32>
    %cst_10 = arith.constant 1.600000e+02 : f32
    %30 = arith.addf %cst_10, %29 : f32
    %31 = arith.addf %21, %30 : f32
    %c0_11 = arith.constant 0 : index
    %c0_12 = arith.constant 0 : index
    %32 = memref.load %arg4[%c0_11, %c0_12] : memref<1x1xf32, #tpu.memory_space<smem>>
    memref.store %31, %arg4[%c0_11, %c0_12] : memref<1x1xf32, #tpu.memory_space<smem>>
    %c0_13 = arith.constant 0 : index
    %c0_14 = arith.constant 0 : index
    %33 = vector.load %arg3[%c0_13, %c0_14] : memref<8x32xf32, #tpu.memory_space<vmem>>, vector<8x32xf32>
    %34 = arith.addf %33, %8 : vector<8x32xf32>
    %c0_15 = arith.constant 0 : index
    %c0_16 = arith.constant 0 : index
    %35 = vector.load %arg3[%c0_15, %c0_16] : memref<8x32xf32, #tpu.memory_space<vmem>>, vector<8x32xf32>
    tpu.vector_store %arg3[%c0_15, %c0_16], %34 {strides = array<i32>} : memref<8x32xf32, #tpu.memory_space<vmem>>, vector<8x32xf32>,
    %c3_i32 = arith.constant 3 : i32
    %36 = arith.cmpi eq, %arg0, %c3_i32 : i32
    %37 = arith.extui %36 : i1 to i32
    %c0_i32_17 = arith.constant 0 : i32
    %38 = arith.cmpi ne, %37, %c0_i32_17 : i32
    scf.if %38 {
      %c0_18 = arith.constant 0 : index
      %c0_19 = arith.constant 0 : index
      %39 = vector.load %arg3[%c0_18, %c0_19] : memref<8x32xf32, #tpu.memory_space<vmem>>, vector<8x32xf32>
      %cst_20 = arith.constant dense<0.000000e+00> : vector<32xf32>
      %40 = vector.multi_reduction <add>, %39, %cst_20 [0] : vector<8x32xf32> to vector<32xf32>
      %41 = vector.shape_cast %40 : vector<32xf32> to vector<1x32xf32>
      %42 = math.log %41 : vector<1x32xf32>
      %43 = vector.shape_cast %42 : vector<1x32xf32> to vector<1x1x32xf32>
      %cst_21 = arith.constant dense<0.000000e+00> : vector<1xf32>
      %44 = vector.multi_reduction <add>, %43, %cst_21 [1, 2] : vector<1x1x32xf32> to vector<1xf32>
      %45 = vector.shape_cast %44 : vector<1xf32> to vector<1x1x1xf32>
      %46 = vector.extract %45[0, 0, 0] : f32 from vector<1x1x1xf32>
      %cst_22 = arith.constant 6.400000e+02 : f32
      %47 = arith.addf %cst_22, %46 : f32
      %c0_23 = arith.constant 0 : index
      %c0_24 = arith.constant 0 : index
      %48 = memref.load %arg4[%c0_23, %c0_24] : memref<1x1xf32, #tpu.memory_space<smem>>
      %49 = arith.addf %48, %47 : f32
      %cst_25 = arith.constant 3.200000e+01 : f32
      %50 = arith.divf %49, %cst_25 : f32
      %c0_26 = arith.constant 0 : index
      %c0_27 = arith.constant 0 : index
      %51 = memref.load %arg2[%c0_26, %c0_27] : memref<1x1xf32, #tpu.memory_space<smem>>
      memref.store %50, %arg2[%c0_26, %c0_27] : memref<1x1xf32, #tpu.memory_space<smem>>
    } else {
    }
    return
  }
  func.func @transform_0(%arg0: i32) -> (i32, i32) {
    %c0_i32 = arith.constant 0 : i32
    %c0_i32_0 = arith.constant 0 : i32
    return %arg0, %c0_i32 : i32, i32
  }
  func.func @transform_1(%arg0: i32) -> (i32, i32) {
    %c0_i32 = arith.constant 0 : i32
    %c0_i32_0 = arith.constant 0 : i32
    %c0_i32_1 = arith.constant 0 : i32
    return %c0_i32, %c0_i32_0 : i32, i32
  }
}

</mosaic_0001>

<llo_original>
// kernel: tpu_custom_call.1
$region0: #{tpu_custom_call.1}
  #allocation0 [shape = 'u32[]', space=smem, size = 0x4, offset = 0x4, fixed_abs, tag = 'smem constant byte address 0x4 - core index']
  #allocation1 [shape = 'u32[144,128]{1,0:T(1,128)}', space=vmem, size = 0x12000, scoped, tag = 'internal scratch']
  #allocation2 [shape = 'f32[8,32]{1,0:T(8,128)}', space=vmem, size = 0x1000, scoped, tag = 'scratch operand']
  #allocation3 [shape = 'f32[1,1]{1,0:T(1,128)}', space=smem, size = 0x200, scoped, tag = 'scratch operand']
  %s0 = inlined_call_operand.hbm [shape: f32[32,32], index: 0, kind: input, shape index: {}]
  %s1 = inlined_call_operand.hbm [shape: f32[1,1], index: 1, kind: output, shape index: {}]
  %s2 = sld [smem:[#allocation0]]
  $region49: #{tpu_custom_call.1} parent=0
    _
  %s4 = ssub.s32 1, %s2
  %s5 = scalar_select 0, %s4, %s2
  $region1: #{tpu_custom_call.1} parent=0
    #allocation4 [shape = 'u8[8192]{0}', space=vmem, size = 0x2000, scoped, tag = 'input window, operand 0']
    #allocation5 [shape = 's32[2]{0}', space=sflag, size = 0x8, scoped, tag = 'scoped memory for tpu_custom_call.1']
    #allocation6 [shape = 's32[2]{0}', space=sflag, size = 0x8, scoped, tag = 'scoped memory for tpu_custom_call.1']
    #allocation7 [shape = 'u8[512]{0}', space=smem, size = 0x200, scoped, tag = 'output window, operand 0, single buffered']
    %6 = vsyncpa [#allocation5], 0
    %s7 = scalar_lea.sflag [#allocation5], 1
    %8 = vsyncpa %s7, 0
    %9 = vsyncpa [#allocation6], 0
    loop: start=0, step=1, limit=6
    $region2: #{tpu_custom_call.1} parent=1 // loop_pre_header
      _
    $region3: #{tpu_custom_call.1} parent=1 // loop_header
      %s11 = sphi 0, %s15
      %p12 = scmp.ge.s32.totalorder %s11, 6
      %s21 = sphi 0, %s23
      %s24 = sphi 0, %s21
      %s25 = sphi 0, %s24
      %s41 = sphi 0, %s25
      %s45 = sphi 0, %s45
      %s47 = sphi 0, %s45
      %s48 = sphi 0, %s47
      %s62 = sphi 0, %s48
    $region4: #{tpu_custom_call.1} parent=1 // loop_header_branch
      %14 = sbr.rel (%p12) target = $region8
    $region5: #{tpu_custom_call.1} parent=1 // loop_body
      %s16 = ssub.s32 %s11, 1
      %s17 = ssub.s32 %s11, 2
      %s18 = sadd.s32 %s11, 1
      %s19 = ssub.s32 %s11, %s18
      %p20 = scmp.eq.s32.totalorder %s19, 0
      %s22 = sadd.s32 %s21, 1
      %s23 = scalar_select %p20, %s21, %s22
      %p26 = pneg %p20
      %p27 = scmp.eq.s32.totalorder %s11, 3
      %p28 = por %p26, %p27
      %p29 = scmp.ne.s32.totalorder %s21, %s24
      %p30 = scmp.eq.s32.totalorder %s11, 0
      %p31 = por %p29, %p30
      %p32 = scmp.ne.s32.totalorder %s21, %s24
      %p33 = scmp.eq.s32.totalorder %s16, 3
      %p34 = por %p32, %p33
      %p35 = scmp.ne.s32.totalorder %s24, %s25
      %p36 = scmp.eq.s32.totalorder %s16, 0
      %p37 = por %p35, %p36
      %p38 = scmp.ne.s32.totalorder %s24, %s25
      %p39 = scmp.eq.s32.totalorder %s17, 3
      %p40 = por %p38, %p39
      %p42 = scmp.ne.s32.totalorder %s25, %s41
      %p43 = scmp.eq.s32.totalorder %s17, 0
      %p44 = por %p42, %p43
      %s46 = sadd.s32 %s45, 1
      %p49 = scmp.eq.s32.totalorder %s11, 3
      %p50 = scmp.ne.s32.totalorder %s45, %s47
      %p51 = scmp.eq.s32.totalorder %s11, 0
      %p52 = por %p50, %p51
      %p53 = scmp.ne.s32.totalorder %s45, %s47
      %p54 = scmp.eq.s32.totalorder %s16, 3
      %p55 = por %p53, %p54
      %p56 = scmp.ne.s32.totalorder %s47, %s48
      %p57 = scmp.eq.s32.totalorder %s16, 0
      %p58 = por %p56, %p57
      %p59 = scmp.ne.s32.totalorder %s47, %s48
      %p60 = scmp.eq.s32.totalorder %s17, 3
      %p61 = por %p59, %p60
      %p63 = scmp.ne.s32.totalorder %s48, %s62
      %p64 = scmp.eq.s32.totalorder %s17, 0
      %p65 = por %p63, %p64
      %p66 = scmp.le.s32.totalorder 1, %s11
      %p67 = scmp.lt.s32.totalorder %s11, 5
      %p68 = pnand %p66, %p67
      %p69 = pneg %p68
      // Predicated region
      $region9: #{tpu_custom_call.1} parent=5 // pred_check
        _
      $region10: #{tpu_custom_call.1} parent=5 // pred_check_branch
        %71 = sbr.rel (%p68) target = $region12
      $region11: #{tpu_custom_call.1} parent=5 // pred_region
        %s72 = ssub.s32 %s11, 1
      $region12: #{tpu_custom_call.1} parent=5 // pred_fallthru
        _
      %p73 = scmp.lt.s32.totalorder %s11, 4
      // Predicated region
      $region13: #{tpu_custom_call.1} parent=5 // pred_check
        %p74 = pneg %p73
      $region14: #{tpu_custom_call.1} parent=5 // pred_check_branch
        %76 = sbr.rel (%p74) target = $region16
      $region15: #{tpu_custom_call.1} parent=5 // pred_region
        // Predicated region
        $region17: #{tpu_custom_call.1} parent=15 // pred_check
          %p77 = pneg %p31
        $region18: #{tpu_custom_call.1} parent=15 // pred_check_branch
          %79 = sbr.rel (%p77) target = $region20
        $region19: #{tpu_custom_call.1} parent=15 // pred_region
          %s80 = sand.u32 %s21, 1
          %s81 = scalar_lea.sflag [#allocation5], %s80
          %s82 = sand.u32 %s21, 1
          %s83 = smul.addr %s82, 8
          %s84 = scalar_lea.vmem [#allocation4], %s83
          %s86 = ssub.s32 128, 128
          %87 = vsyncadd %s81, %s86
          %s88 = smul.addr %s11, 128
          %s89 = scalar_lea.hbm %s0, %s88
          %s91 = sshll.u32 %s84, 4
          %s92 = int_to_ptr.vmem [resolvable:$true] %s91
          %94 = dma.hbm_to_vmem [thread:$0]  %s89, 128, %s92, %s81
        $region20: #{tpu_custom_call.1} parent=15 // pred_fallthru
          _
      $region16: #{tpu_custom_call.1} parent=5 // pred_fallthru
        _
      %p95 = scmp.le.s32.totalorder 1, %s11
      %p96 = scmp.lt.s32.totalorder %s11, 5
      %p97 = pnand %p95, %p96
      %p98 = pneg %p97
      // Predicated region
      $region21: #{tpu_custom_call.1} parent=5 // pred_check
        _
      $region22: #{tpu_custom_call.1} parent=5 // pred_check_branch
        %100 = sbr.rel (%p97) target = $region24
      $region23: #{tpu_custom_call.1} parent=5 // pred_region
        %s101 = ssub.s32 %s11, 1
        %s102 = sand.u32 %s24, 1
        %s103 = scalar_lea.sflag [#allocation5], %s102
        %s104 = sand.u32 %s24, 1
        %s105 = smul.addr %s104, 8
        %s106 = scalar_lea.vmem [#allocation4], %s105
        // Predicated region
        $region25: #{tpu_custom_call.1} parent=23 // pred_check
          %p107 = pneg %p37
        $region26: #{tpu_custom_call.1} parent=23 // pred_check_branch
          %109 = sbr.rel (%p107) target = $region28
        $region27: #{tpu_custom_call.1} parent=23 // pred_region
          %110 = dma.done %s103, 128
        $region28: #{tpu_custom_call.1} parent=23 // pred_fallthru
          _
        %s111 = sand.u32 %s24, 1
        %s112 = scalar_lea.sflag [#allocation5], %s111
        %s113 = sand.u32 %s24, 1
        %s114 = smul.addr %s113, 8
        %s115 = scalar_lea.vmem [#allocation4], %s114
        %p116 = pneg %p37
        %p117 = pneg %p34
        %p118 = pneg %p58
        %p119 = pneg %p55
        %p120 = scmp.eq.s32.totalorder %s16, 0
        // Predicated region
        $region29: #{tpu_custom_call.1} parent=23 // pred_check
          %p121 = pneg %p120
        $region30: #{tpu_custom_call.1} parent=23 // pred_check_branch
          %123 = sbr.rel (%p121) target = $region32
        $region31: #{tpu_custom_call.1} parent=23 // pred_region
          %vm124 = vcmask 261120
          %125 = vst.msk [vmem:[#allocation2] sm:$0xff] %vm124, 0.0
          %s126 = scalar_lea.smem [#allocation3], 0
          %127 = sst [smem:[%s126]] 0.0
        $region32: #{tpu_custom_call.1} parent=23 // pred_fallthru
          _
        %v128 = vld [vmem:[%s106] sm:$0xff]
        %v129 = vmul.f32 %v128, 20.0
        %v130 = vsub.f32 %v129, 20.0
        %v131 = vmul.f32 %v130, 1.442695
        %v132 = vpow.pop %v131
        %vm133 = vcmask 261120
        %v134 = vsel %vm133, %v132, 0.0
        %135 = vadd.xlane.f32.xlu0 %v134
        %v136 = vpop.xlane.xlu0 %135
        %v137 = vlaneseq
        %v138 = vshrl.u32 %v137, 7
        %v139 = vlaneseq
        %v140 = vand.u32 %v139, 127
        %s141 = smul.u32 %s16, 8
        %v142 = vstv %s141
        %v143 = vadd.s32 %v142, %v138
        %vm144 = vcmp.eq.s32.totalorder %v140, %v143
        %v145 = vsel %vm144, %v129, 0.0
        %v146 = vsel %vm133, %v145, 0.0
        %147 = vadd.xlane.f32.xlu0 %v146
        %v148 = vpop.xlane.xlu0 %147
        %s149 = sld [smem:[#allocation3]]
        %v150 = vlog2.pop %v136
        %v151 = vmul.f32 %v150, 0.6931472
        %v152 = vmul.f32 %v148, 2.0
        %v153 = vsub.f32 %v151, %v152
        %vm154 = vcmask 7168
        %v155 = vsel %vm154, %v153, 0.0
        %156 = vadd.xlane.f32.xlu0 %v155
        %v157 = vpop.xlane.xlu0 %156
        %v158 = vrot.slane %v157, 4
        %v159 = vadd.f32 %v157, %v158
        %v160 = vrot.slane %v159, 2
        %v161 = vadd.f32 %v159, %v160
        %v162 = vrot.slane %v161, 1
        %v163 = vadd.f32 %v161, %v162
        %s164 = vtos %v163
        %s165 = sadd.f32 %s164, 160.0
        %s166 = sadd.f32 %s149, %s165
        %s167 = scalar_lea.smem [#allocation3], 0
        %168 = sst [smem:[%s167]] %s166
        %v169 = vld [vmem:[#allocation2] sm:$0xff]
        %v170 = vadd.f32 %v169, %v132
        %171 = vst.msk [vmem:[#allocation2] sm:$0xff] %vm133, %v170
        %p172 = scmp.eq.s32.totalorder %s16, 3
        // Predicated region
        $region33: #{tpu_custom_call.1} parent=23 // pred_check
          %p173 = pneg %p172
        $region34: #{tpu_custom_call.1} parent=23 // pred_check_branch
          %175 = sbr.rel (%p173) target = $region36
        $region35: #{tpu_custom_call.1} parent=23 // pred_region
          %v176 = vld [vmem:[#allocation2] sm:$0xff]
          %v177 = vsel %vm133, %v176, 0.0
          %v178 = vrot.slane %v177, 4
          %v179 = vadd.f32 %v177, %v178
          %v180 = vrot.slane %v179, 2
          %v181 = vadd.f32 %v179, %v180
          %v182 = vrot.slane %v181, 1
          %v183 = vadd.f32 %v181, %v182
          %v184 = vlog2.pop %v183
          %v185 = vmul.f32 %v184, 0.6931472
          %vm186 = vcmask 253952
          %v187 = vsel %vm186, %v185, 0.0
          %188 = vadd.xlane.f32.xlu0 %v187
          %v189 = vpop.xlane.xlu0 %188
          %v190 = vrot.slane %v189, 4
          %v191 = vadd.f32 %v189, %v190
          %v192 = vrot.slane %v191, 2
          %v193 = vadd.f32 %v191, %v192
          %v194 = vrot.slane %v193, 1
          %v195 = vadd.f32 %v193, %v194
          %s196 = vtos %v195
          %s197 = sadd.f32 %s196, 640.0
          %s198 = sld [smem:[#allocation3]]
          %s199 = sadd.f32 %s198, %s197
          %v200 = vrcp.pop 32.0
          %s201 = vtos %v200
          %s202 = smul.f32 %s199, %s201
          %s203 = scalar_lea.smem [#allocation7], 0
          %204 = sst [smem:[%s203]] %s202
        $region36: #{tpu_custom_call.1} parent=23 // pred_fallthru
          _
        // Predicated region
        $region37: #{tpu_custom_call.1} parent=23 // pred_check
          %p205 = pneg %p55
        $region38: #{tpu_custom_call.1} parent=23 // pred_check_branch
          %207 = sbr.rel (%p205) target = $region40
        $region39: #{tpu_custom_call.1} parent=23 // pred_region
          %s209 = ssub.s32 16, 16
          %210 = vsyncadd [#allocation6], %s209
          %213 = dma.smem_to_hbm [#allocation7], 16, %s1, [#allocation6]
        $region40: #{tpu_custom_call.1} parent=23 // pred_fallthru
          _
        // Predicated region
        $region41: #{tpu_custom_call.1} parent=23 // pred_check
          %p214 = pneg %p55
        $region42: #{tpu_custom_call.1} parent=23 // pred_check_branch
          %216 = sbr.rel (%p214) target = $region44
        $region43: #{tpu_custom_call.1} parent=23 // pred_region
          %217 = dma.done [#allocation6], 16
        $region44: #{tpu_custom_call.1} parent=23 // pred_fallthru
          _
        %218 = sfence
      $region24: #{tpu_custom_call.1} parent=5 // pred_fallthru
        _
      %p219 = scmp.le.s32.totalorder 2, %s11
      // Predicated region
      $region45: #{tpu_custom_call.1} parent=5 // pred_check
        %p220 = pneg %p219
      $region46: #{tpu_custom_call.1} parent=5 // pred_check_branch
        %222 = sbr.rel (%p220) target = $region48
      $region47: #{tpu_custom_call.1} parent=5 // pred_region
        %s223 = ssub.s32 %s11, 2
      $region48: #{tpu_custom_call.1} parent=5 // pred_fallthru
        _
    $region6: #{tpu_custom_call.1} parent=1 // loop_footer
      %s15 = sadd.s32 1, %s11
    $region7: #{tpu_custom_call.1} parent=1 // loop_footer_branch
      %10 = sbr.rel target = $region3
    $region8: #{tpu_custom_call.1} parent=1 // loop_exit
      _
    %224 = vsyncpa [#allocation5], 1
    %s225 = scalar_lea.sflag [#allocation5], 1
    %226 = vsyncpa %s225, 1
    %227 = vsyncpa [#allocation6], 1
    %s228 = scalar_lea.sflag [#allocation6], 1
    %229 = vsyncpa %s228, 1

</llo_original>
